<compile_context>
chip_gen: v5e
topology: v5e:2x2
jax: 0.10.0
libtpu: 0.0.40
codegen_flags: <defaults>
</compile_context>

<pallas_src>
import jax
import jax.numpy as jnp
from jax.experimental import pallas as pl
from jax.experimental.pallas import tpu as pltpu


def _low_precision_tanh_default():
    """bf16 tanh only on chips with a bf16 EUP path (v6e / v7x); f32 elsewhere."""
    try:
        kind = jax.devices()[0].device_kind.lower()
    except Exception:
        return False
    return any(tag in kind for tag in ("v6", "v7", "7x", "trillium"))


def _make_mlp_kernel(num_layers, compute_dtype, low_precision_tanh):
    """Fused MLP kernel; activations kept as [features, batch_tile] (lane-dense)."""
    compute_dtype = jnp.dtype(compute_dtype)
    f32 = jnp.dtype(jnp.float32)
    exact_softmax = compute_dtype == f32

    def kernel(*refs):
        # refs = (x_ref, w_0..w_{L-1}, b_0..b_{L-1}, o_ref)
        x_ref = refs[0]
        w_refs = refs[1:1 + num_layers]
        b_refs = refs[1 + num_layers:1 + 2 * num_layers]
        o_ref = refs[-1]

        # x block arrives as [batch_tile, in_dim] f32 straight from HBM.
        # Transpose on the XLU (otherwise idle) + cast so the whole MLP runs
        # with batch on the lane axis.
        h = x_ref[...].T.astype(compute_dtype)              # [in_dim, bt]

        for i in range(num_layers):
            # MXU matmul, f32 accumulation; bias [out_i, 1] broadcasts over lanes.
            h = jnp.dot(w_refs[i][...], h, preferred_element_type=jnp.float32)
            h = h + b_refs[i][...]
            if i < num_layers - 1:
                if low_precision_tanh and compute_dtype != f32:
                    h = jnp.tanh(h.astype(compute_dtype))   # bf16 EUP (v6e/v7x)
                else:
                    h = jnp.tanh(h).astype(compute_dtype)    # f32 EUP (v5e / f32)

        # softmax over classes: axis 0 == sublanes (8 wide), fully dense.
        m = jnp.max(h, axis=0, keepdims=True)                # [1, bt]
        e = jnp.exp(h - m)
        s = jnp.sum(e, axis=0, keepdims=True)
        if exact_softmax:
            probs = e / s                                     # exact on the f32 path
        else:
            probs = e * pl.reciprocal(s, approx=True)         # EUP slot, ~free

        # In-kernel transpose back to [batch_tile, out_dim] so the HBM result is
        # already in torch layout (no wrapper transpose pass).
        o_ref[...] = probs.T.astype(o_ref.dtype)

    return kernel


def _pick_batch_tile(B, layer_dims, compute_dtype, out_dtype,
                     max_tile=16384, vmem_budget_bytes=20 * 1024 * 1024):
    """Largest batch tile (multiple of 128) whose VMEM footprint fits the budget.

    Budget is sized against the smallest generation (v7x: 64 MiB physical,
    32 MiB scoped default) with double-buffered input/output blocks plus live
    in-kernel intermediates, all O(bytes-per-batch-element).
    """
    cd = jnp.dtype(compute_dtype).itemsize
    od = jnp.dtype(out_dtype).itemsize
    in_dim, out_dim = layer_dims[0], layer_dims[-1]
    per_row = 2 * 4 * in_dim + 2 * od * out_dim            # pipelined (2x) blocks
    per_row += (4 + cd) * sum(layer_dims) + 4 * 4 * out_dim  # live intermediates
    cap = max(128, (vmem_budget_bytes // max(per_row, 1)) // 128 * 128)
    cap = min(cap, max_tile)
    if B <= cap:
        return B
    for t in range(cap, 127, -128):    # prefer exact division (no padded tail)
        if B % t == 0:
            return t
    return cap                          # pl.cdiv grid handles the partial tail


def mlp_pso_forward(x, weights, biases, *, batch_tile=None,
                    compute_dtype=jnp.bfloat16, out_dtype=jnp.float32,
                    low_precision_tanh=None):
    """ExtendedModelPSO.forward as one fused Pallas kernel.

    x:       [B, input_dim] float32 (streamed as-is; cast happens in-kernel)
    weights: list of [out_i, in_i] float32 (torch nn.Linear.weight layout)
    biases:  list of [out_i] float32
    returns: [B, output_dim] out_dtype, softmax over dim=1
    """
    num_layers = len(weights)
    B, in_dim = x.shape
    out_dim = int(weights[-1].shape[0])
    layer_dims = [in_dim] + [int(w.shape[0]) for w in weights]

    if low_precision_tanh is None:
        low_precision_tanh = _low_precision_tanh_default()
    if batch_tile is None:
        batch_tile = _pick_batch_tile(B, layer_dims, compute_dtype, out_dtype)
    grid = (pl.cdiv(B, batch_tile),)

    x = jnp.asarray(x, jnp.float32)                                  # no extra HBM pass
    ws = [jnp.asarray(w, compute_dtype) for w in weights]            # tiny, VMEM-resident
    bs = [jnp.asarray(b, jnp.float32).reshape(-1, 1) for b in biases]  # [out_i, 1]

    kernel = _make_mlp_kernel(num_layers, compute_dtype, low_precision_tanh)

    x_spec = pl.BlockSpec((batch_tile, in_dim), lambda i: (i, 0))
    w_specs = [pl.BlockSpec(w.shape, lambda i: (0, 0)) for w in ws]  # constant -> resident
    b_specs = [pl.BlockSpec(b.shape, lambda i: (0, 0)) for b in bs]
    out_spec = pl.BlockSpec((batch_tile, out_dim), lambda i: (i, 0))

    cd_bytes = jnp.dtype(compute_dtype).itemsize
    cost = pl.CostEstimate(
        flops=2 * B * sum(int(w.shape[0]) * int(w.shape[1]) for w in weights),
        transcendentals=B * (sum(int(w.shape[0]) for w in weights[:-1]) + out_dim),
        bytes_accessed=(B * in_dim * 4 + B * out_dim * jnp.dtype(out_dtype).itemsize
                        + sum(int(w.size) * cd_bytes for w in ws)
                        + sum(int(b.size) * 4 for b in bs)),
    )

    return pl.pallas_call(
        kernel,
        out_shape=jax.ShapeDtypeStruct((B, out_dim), out_dtype),
        grid_spec=pltpu.PrefetchScalarGridSpec(
            num_scalar_prefetch=0,
            grid=grid,
            in_specs=[x_spec] + w_specs + b_specs,
            out_specs=out_spec,
        ),
        compiler_params=pltpu.CompilerParams(
            # "parallel" lets the batch-tile axis shard across TensorCores on
            # multi-core parts (v7x); tiles are sized so the grid has >=2 steps
            # for large B.
            dimension_semantics=("parallel",),
            vmem_limit_bytes=32 * 1024 * 1024,
        ),
        cost_estimate=cost,
    )(x, *ws, *bs)


def init_params(key, input_dim, hidden_layers, output_dim):
    """Deterministic torch.nn.Linear-style init; weights in torch layout [out, in]."""
    dims = [input_dim] + list(hidden_layers) + [output_dim]
    weights, biases = [], []
    for i in range(len(dims) - 1):
        fan_in, fan_out = dims[i], dims[i + 1]
        key, kw, kb = jax.random.split(key, 3)
        bound = 1.0 / jnp.sqrt(jnp.float32(fan_in))
        w = jax.random.uniform(kw, (fan_out, fan_in), jnp.float32, -bound, bound)
        b = jax.random.uniform(kb, (fan_out,), jnp.float32, -bound, bound)
        weights.append(w)
        biases.append(b)
    return weights, biases


def reference_forward(x, weights, biases):
    h = x
    for i in range(len(weights)):
        h = h @ weights[i].T + biases[i]
        if i < len(weights) - 1:
            h = jnp.tanh(h)
    return jax.nn.softmax(h, axis=1)


if __name__ == "__main__":
    # Small shapes consistent with the module's forward: X is [batch, input_dim].
    batch = 8
    input_dim = 16
    hidden_layers = [32, 32]
    output_dim = 8

    key = jax.random.PRNGKey(0)
    key, kx = jax.random.split(key)
    x = jax.random.normal(kx, (batch, input_dim), dtype=jnp.float32)
    weights, biases = init_params(key, input_dim, hidden_layers, output_dim)

    ref = reference_forward(x, weights, biases)

    # Default (bf16-compute) path.
    out = jax.block_until_ready(mlp_pso_forward(x, weights, biases))
    assert out.shape == (batch, output_dim)
    assert jnp.allclose(out, ref, atol=3e-2, rtol=3e-2), "bf16 path mismatch vs reference"
    assert jnp.allclose(jnp.sum(out, axis=1), jnp.ones((batch,)), atol=1e-2)

    # Full-f32 path (exact softmax division), tighter tolerance.
    out_f32 = jax.block_until_ready(
        mlp_pso_forward(x, weights, biases, compute_dtype=jnp.float32))
    assert jnp.allclose(out_f32, ref, atol=1e-3, rtol=1e-3), "f32 path mismatch vs reference"
    assert jnp.allclose(jnp.sum(out_f32, axis=1), jnp.ones((batch,)), atol=1e-4)

    # Larger batch exercising the multi-step pipelined / parallel grid (4 tiles of 256).
    xb = jax.random.normal(jax.random.PRNGKey(1), (1024, input_dim), dtype=jnp.float32)
    refb = reference_forward(xb, weights, biases)
    outb = jax.block_until_ready(mlp_pso_forward(xb, weights, biases, batch_tile=256))
    assert outb.shape == (1024, output_dim)
    assert jnp.allclose(outb, refb, atol=3e-2, rtol=3e-2), "tiled path mismatch vs reference"

    # Non-divisible batch -> partial final block (padded lanes must not bleed).
    xr = jax.random.normal(jax.random.PRNGKey(2), (200, input_dim), dtype=jnp.float32)
    refr = reference_forward(xr, weights, biases)
    outr = jax.block_until_ready(mlp_pso_forward(xr, weights, biases, batch_tile=128))
    assert outr.shape == (200, output_dim)
    assert jnp.all(jnp.isfinite(outr)), "NaN/inf bleed from padded block"
    assert jnp.allclose(outr, refr, atol=3e-2, rtol=3e-2), "partial-block path mismatch"

    print("KERNEL_OK")
</pallas_src>

<mosaic_0001>
module attributes {stable_mosaic.version = 11 : i64} {
  func.func @kernel(%arg0: i32, %arg1: memref<8x16xf32, #tpu.memory_space<vmem>>, %arg2: memref<32x16xbf16, #tpu.memory_space<vmem>>, %arg3: memref<32x32xbf16, #tpu.memory_space<vmem>>, %arg4: memref<8x32xbf16, #tpu.memory_space<vmem>>, %arg5: memref<32x1xf32, #tpu.memory_space<vmem>>, %arg6: memref<32x1xf32, #tpu.memory_space<vmem>>, %arg7: memref<8x1xf32, #tpu.memory_space<vmem>>, %arg8: memref<8x8xf32, #tpu.memory_space<vmem>>) attributes {dimension_semantics = [#tpu.dimension_semantics<parallel>], iteration_bounds = array<i64: 1>, scalar_prefetch = 0 : i64, scratch_operands = 0 : i64, tpu.core_type = #tpu.core_type<tc>, window_params = [{transform_indices = @transform_0, window_bounds = array<i64: 8, 16>}, {pipeline_mode = #tpu.pipeline_mode<synchronous>, transform_indices = @transform_1, window_bounds = array<i64: 32, 16>}, {pipeline_mode = #tpu.pipeline_mode<synchronous>, transform_indices = @transform_2, window_bounds = array<i64: 32, 32>}, {pipeline_mode = #tpu.pipeline_mode<synchronous>, transform_indices = @transform_3, window_bounds = array<i64: 8, 32>}, {pipeline_mode = #tpu.pipeline_mode<synchronous>, transform_indices = @transform_4, window_bounds = array<i64: 32, 1>}, {pipeline_mode = #tpu.pipeline_mode<synchronous>, transform_indices = @transform_5, window_bounds = array<i64: 32, 1>}, {pipeline_mode = #tpu.pipeline_mode<synchronous>, transform_indices = @transform_6, window_bounds = array<i64: 8, 1>}, {transform_indices = @transform_7, window_bounds = array<i64: 8, 8>}]} {
    %c0 = arith.constant 0 : index
    %c0_0 = arith.constant 0 : index
    %0 = vector.load %arg1[%c0, %c0_0] : memref<8x16xf32, #tpu.memory_space<vmem>>, vector<8x16xf32>
    %1 = tpu.transpose %0, [1, 0] : vector<8x16xf32> -> vector<16x8xf32>
    %2 = arith.truncf %1 : vector<16x8xf32> to vector<16x8xbf16>
    %c0_1 = arith.constant 0 : index
    %c0_2 = arith.constant 0 : index
    %3 = vector.load %arg2[%c0_1, %c0_2] : memref<32x16xbf16, #tpu.memory_space<vmem>>, vector<32x16xbf16>
    %cst = arith.constant dense<0.000000e+00> : vector<32x8xf32>
    %4 = tpu.matmul %3, %2, %cst {dimension_numbers = #tpu.dot_dimension_numbers<[1], [0], [0], [1], [0, 0, 1, 1], [], []>} : vector<32x16xbf16>, vector<16x8xbf16>, vector<32x8xf32> -> vector<32x8xf32>
    %c0_3 = arith.constant 0 : index
    %c0_4 = arith.constant 0 : index
    %5 = vector.load %arg5[%c0_3, %c0_4] : memref<32x1xf32, #tpu.memory_space<vmem>>, vector<32x1xf32>
    %6 = vector.broadcast %5 : vector<32x1xf32> to vector<32x8xf32>
    %7 = arith.addf %4, %6 : vector<32x8xf32>
    %8 = math.tanh %7 : vector<32x8xf32>
    %9 = arith.truncf %8 : vector<32x8xf32> to vector<32x8xbf16>
    %c0_5 = arith.constant 0 : index
    %c0_6 = arith.constant 0 : index
    %10 = vector.load %arg3[%c0_5, %c0_6] : memref<32x32xbf16, #tpu.memory_space<vmem>>, vector<32x32xbf16>
    %cst_7 = arith.constant dense<0.000000e+00> : vector<32x8xf32>
    %11 = tpu.matmul %10, %9, %cst_7 {dimension_numbers = #tpu.dot_dimension_numbers<[1], [0], [0], [1], [0, 0, 1, 1], [], []>} : vector<32x32xbf16>, vector<32x8xbf16>, vector<32x8xf32> -> vector<32x8xf32>
    %c0_8 = arith.constant 0 : index
    %c0_9 = arith.constant 0 : index
    %12 = vector.load %arg6[%c0_8, %c0_9] : memref<32x1xf32, #tpu.memory_space<vmem>>, vector<32x1xf32>
    %13 = vector.broadcast %12 : vector<32x1xf32> to vector<32x8xf32>
    %14 = arith.addf %11, %13 : vector<32x8xf32>
    %15 = math.tanh %14 : vector<32x8xf32>
    %16 = arith.truncf %15 : vector<32x8xf32> to vector<32x8xbf16>
    %c0_10 = arith.constant 0 : index
    %c0_11 = arith.constant 0 : index
    %17 = vector.load %arg4[%c0_10, %c0_11] : memref<8x32xbf16, #tpu.memory_space<vmem>>, vector<8x32xbf16>
    %cst_12 = arith.constant dense<0.000000e+00> : vector<8x8xf32>
    %18 = tpu.matmul %17, %16, %cst_12 {dimension_numbers = #tpu.dot_dimension_numbers<[1], [0], [0], [1], [0, 0, 1, 1], [], []>} : vector<8x32xbf16>, vector<32x8xbf16>, vector<8x8xf32> -> vector<8x8xf32>
    %c0_13 = arith.constant 0 : index
    %c0_14 = arith.constant 0 : index
    %19 = vector.load %arg7[%c0_13, %c0_14] : memref<8x1xf32, #tpu.memory_space<vmem>>, vector<8x1xf32>
    %20 = vector.broadcast %19 : vector<8x1xf32> to vector<8x8xf32>
    %21 = arith.addf %18, %20 : vector<8x8xf32>
    %cst_15 = arith.constant dense<0xFF800000> : vector<8xf32>
    %22 = vector.multi_reduction <maximumf>, %21, %cst_15 [0] : vector<8x8xf32> to vector<8xf32>
    %23 = vector.shape_cast %22 : vector<8xf32> to vector<1x8xf32>
    %24 = vector.broadcast %23 : vector<1x8xf32> to vector<8x8xf32>
    %25 = arith.subf %21, %24 : vector<8x8xf32>
    %26 = math.exp %25 : vector<8x8xf32>
    %cst_16 = arith.constant dense<0.000000e+00> : vector<8xf32>
    %27 = vector.multi_reduction <add>, %26, %cst_16 [0] : vector<8x8xf32> to vector<8xf32>
    %28 = vector.shape_cast %27 : vector<8xf32> to vector<1x8xf32>
    %29 = tpu.reciprocal %28 {approx = true} : vector<1x8xf32> -> vector<1x8xf32>
    %30 = vector.broadcast %29 : vector<1x8xf32> to vector<8x8xf32>
    %31 = arith.mulf %26, %30 : vector<8x8xf32>
    %32 = tpu.transpose %31, [1, 0] : vector<8x8xf32> -> vector<8x8xf32>
    %c0_17 = arith.constant 0 : index
    %c0_18 = arith.constant 0 : index
    %33 = vector.load %arg8[%c0_17, %c0_18] : memref<8x8xf32, #tpu.memory_space<vmem>>, vector<8x8xf32>
    tpu.vector_store %arg8[%c0_17, %c0_18], %32 {strides = array<i32>} : memref<8x8xf32, #tpu.memory_space<vmem>>, vector<8x8xf32>,
    return
  }
  func.func @transform_0(%arg0: i32) -> (i32, i32) {
    %c0_i32 = arith.constant 0 : i32
    %c0_i32_0 = arith.constant 0 : i32
    return %arg0, %c0_i32 : i32, i32
  }
  func.func @transform_1(%arg0: i32) -> (i32, i32) {
    %c0_i32 = arith.constant 0 : i32
    %c0_i32_0 = arith.constant 0 : i32
    %c0_i32_1 = arith.constant 0 : i32
    return %c0_i32, %c0_i32_0 : i32, i32
  }
  func.func @transform_2(%arg0: i32) -> (i32, i32) {
    %c0_i32 = arith.constant 0 : i32
    %c0_i32_0 = arith.constant 0 : i32
    %c0_i32_1 = arith.constant 0 : i32
    return %c0_i32, %c0_i32_0 : i32, i32
  }
  func.func @transform_3(%arg0: i32) -> (i32, i32) {
    %c0_i32 = arith.constant 0 : i32
    %c0_i32_0 = arith.constant 0 : i32
    %c0_i32_1 = arith.constant 0 : i32
    return %c0_i32, %c0_i32_0 : i32, i32
  }
  func.func @transform_4(%arg0: i32) -> (i32, i32) {
    %c0_i32 = arith.constant 0 : i32
    %c0_i32_0 = arith.constant 0 : i32
    %c0_i32_1 = arith.constant 0 : i32
    return %c0_i32, %c0_i32_0 : i32, i32
  }
  func.func @transform_5(%arg0: i32) -> (i32, i32) {
    %c0_i32 = arith.constant 0 : i32
    %c0_i32_0 = arith.constant 0 : i32
    %c0_i32_1 = arith.constant 0 : i32
    return %c0_i32, %c0_i32_0 : i32, i32
  }
  func.func @transform_6(%arg0: i32) -> (i32, i32) {
    %c0_i32 = arith.constant 0 : i32
    %c0_i32_0 = arith.constant 0 : i32
    %c0_i32_1 = arith.constant 0 : i32
    return %c0_i32, %c0_i32_0 : i32, i32
  }
  func.func @transform_7(%arg0: i32) -> (i32, i32) {
    %c0_i32 = arith.constant 0 : i32
    %c0_i32_0 = arith.constant 0 : i32
    return %arg0, %c0_i32 : i32, i32
  }
}

</mosaic_0001>

<llo_original>
// kernel: tpu_custom_call.1
$region0: #{tpu_custom_call.1}
  #allocation0 [shape = 'u32[]', space=smem, size = 0x4, offset = 0x4, fixed_abs, tag = 'smem constant byte address 0x4 - core index']
  #allocation1 [shape = 'u32[72,128]{1,0:T(1,128)}', space=vmem, size = 0x9000, scoped, tag = 'internal scratch']
  %s0 = inlined_call_operand.vmem [shape: f32[8,16], index: 0, kind: input, shape index: {}]
  %s1 = inlined_call_operand.vmem [shape: bf16[32,16], index: 1, kind: input, shape index: {}]
  %s2 = inlined_call_operand.vmem [shape: bf16[32,32], index: 2, kind: input, shape index: {}]
  %s3 = inlined_call_operand.vmem [shape: bf16[8,32], index: 3, kind: input, shape index: {}]
  %s4 = inlined_call_operand.vmem [shape: f32[32,1], index: 4, kind: input, shape index: {}]
  %s5 = inlined_call_operand.vmem [shape: f32[32,1], index: 5, kind: input, shape index: {}]
  %s6 = inlined_call_operand.vmem [shape: f32[8,1], index: 6, kind: input, shape index: {}]
  %s7 = inlined_call_operand.hbm [shape: f32[8,8], index: 7, kind: output, shape index: {}]
  %s8 = sld [smem:[#allocation0]]
  $region38: #{tpu_custom_call.1} parent=0
    _
  %s10 = ssub.s32 1, %s8
  %s11 = scalar_select 0, %s10, %s8
  $region1: #{tpu_custom_call.1} parent=0
    #allocation2 [shape = 'u8[4096]{0}', space=vmem, size = 0x1000, scoped, tag = 'output window, operand 0, single buffered']
    #allocation3 [shape = 's32[1]{0}', space=sflag, size = 0x4, scoped, tag = 'scoped memory for tpu_custom_call.1']
    %12 = vsyncpa [#allocation3], 0
    // Predicated region
    $region2: #{tpu_custom_call.1} parent=1 // pred_check
      _
    $region3: #{tpu_custom_call.1} parent=1 // pred_check_branch
      %14 = sbr.rel (0) target = $region5
    $region4: #{tpu_custom_call.1} parent=1 // pred_region
      _
    $region5: #{tpu_custom_call.1} parent=1 // pred_fallthru
      _
    // Predicated region
    $region6: #{tpu_custom_call.1} parent=1 // pred_check
      _
    $region7: #{tpu_custom_call.1} parent=1 // pred_check_branch
      %16 = sbr.rel (0) target = $region9
    $region8: #{tpu_custom_call.1} parent=1 // pred_region
      _
    $region9: #{tpu_custom_call.1} parent=1 // pred_fallthru
      _
    // Predicated region
    $region10: #{tpu_custom_call.1} parent=1 // pred_check
      _
    $region11: #{tpu_custom_call.1} parent=1 // pred_check_branch
      %18 = sbr.rel (0) target = $region13
    $region12: #{tpu_custom_call.1} parent=1 // pred_region
      _
    $region13: #{tpu_custom_call.1} parent=1 // pred_fallthru
      _
    // Predicated region
    $region14: #{tpu_custom_call.1} parent=1 // pred_check
      _
    $region15: #{tpu_custom_call.1} parent=1 // pred_check_branch
      %20 = sbr.rel (0) target = $region17
    $region16: #{tpu_custom_call.1} parent=1 // pred_region
      _
    $region17: #{tpu_custom_call.1} parent=1 // pred_fallthru
      _
    // Predicated region
    $region18: #{tpu_custom_call.1} parent=1 // pred_check
      _
    $region19: #{tpu_custom_call.1} parent=1 // pred_check_branch
      %22 = sbr.rel (0) target = $region21
    $region20: #{tpu_custom_call.1} parent=1 // pred_region
      _
    $region21: #{tpu_custom_call.1} parent=1 // pred_fallthru
      _
    // Predicated region
    $region22: #{tpu_custom_call.1} parent=1 // pred_check
      _
    $region23: #{tpu_custom_call.1} parent=1 // pred_check_branch
      %24 = sbr.rel (0) target = $region25
    $region24: #{tpu_custom_call.1} parent=1 // pred_region
      _
    $region25: #{tpu_custom_call.1} parent=1 // pred_fallthru
      _
    // Predicated region
    $region26: #{tpu_custom_call.1} parent=1 // pred_check
      _
    $region27: #{tpu_custom_call.1} parent=1 // pred_check_branch
      %26 = sbr.rel (0) target = $region29
    $region28: #{tpu_custom_call.1} parent=1 // pred_region
      _
    $region29: #{tpu_custom_call.1} parent=1 // pred_fallthru
      _
    %v28 = vld [vmem:[%s0] sm:$0xff]
    %29 = vxpose.xlu0.b32.start [1/16] %v28, 128
    %30 = vxpose.xlu0.b32.cont [2/16] 0.0, 128
    %31 = vxpose.xlu0.b32.cont [3/16] 0.0, 128
    %32 = vxpose.xlu0.b32.cont [4/16] 0.0, 128
    %33 = vxpose.xlu0.b32.cont [5/16] 0.0, 128
    %34 = vxpose.xlu0.b32.cont [6/16] 0.0, 128
    %35 = vxpose.xlu0.b32.cont [7/16] 0.0, 128
    %36 = vxpose.xlu0.b32.cont [8/16] 0.0, 128
    %37 = vxpose.xlu0.b32.cont [9/16] 0.0, 128
    %38 = vxpose.xlu0.b32.cont [10/16] 0.0, 128
    %39 = vxpose.xlu0.b32.cont [11/16] 0.0, 128
    %40 = vxpose.xlu0.b32.cont [12/16] 0.0, 128
    %41 = vxpose.xlu0.b32.cont [13/16] 0.0, 128
    %42 = vxpose.xlu0.b32.cont [14/16] 0.0, 128
    %43 = vxpose.xlu0.b32.cont [15/16] 0.0, 128
    %44 = vxpose.xlu0.b32.end [16/16] 0.0, 128
    %v45 = vpop.trf.xlu0
    %v46 = vpop.trf.xlu0
    %v47 = vpop.trf.xlu0
    %v48 = vpop.trf.xlu0
    %v49 = vpop.trf.xlu0
    %v50 = vpop.trf.xlu0
    %v51 = vpop.trf.xlu0
    %v52 = vpop.trf.xlu0
    %v53 = vpop.trf.xlu0
    %v54 = vpop.trf.xlu0
    %v55 = vpop.trf.xlu0
    %v56 = vpop.trf.xlu0
    %v57 = vpop.trf.xlu0
    %v58 = vpop.trf.xlu0
    %v59 = vpop.trf.xlu0
    %v60 = vpop.trf.xlu0
    %v61 = vpack.c.bf16 %v46, %v45
    %v62 = vld [vmem:[%s1] sm:$0xf]
    %v63 = vld [vmem:[%s1 + $0x4] sm:$0xf]
    %v64 = vld [vmem:[%s1 + $0x8] sm:$0xf]
    %v65 = vld [vmem:[%s1 + $0xc] sm:$0xf]
    %v66 = vld [vmem:[%s4] sm:$0xff]
    %v67 = vld [vmem:[%s4 + $0x8] sm:$0xff]
    %v68 = vld [vmem:[%s4 + $0x10] sm:$0xff]
    %v69 = vld [vmem:[%s4 + $0x18] sm:$0xff]
    %71 = vset.pattern.permute.xlu0 0
    %72 = vperm.xlu0 %71, %v66
    %v73 = vpop.permute.xlu0 %72
    %76 = vset.pattern.permute.xlu0 0
    %77 = vperm.xlu0 %76, %v67
    %v78 = vpop.permute.xlu0 %77
    %81 = vset.pattern.permute.xlu0 0
    %82 = vperm.xlu0 %81, %v68
    %v83 = vpop.permute.xlu0 %82
    %86 = vset.pattern.permute.xlu0 0
    %87 = vperm.xlu0 %86, %v69
    %v88 = vpop.permute.xlu0 %87
    %v94 = vunpack.c.l.b16 %v62
    %v95 = vunpack.c.l.b16 %v63
    %v96 = vunpack.c.l.b16 %v64
    %v97 = vunpack.c.l.b16 %v65
    %v98 = vpack.c.b16 %v95, %v94
    %v99 = vpack.c.b16 %v97, %v96
    %vm100 = vcmask 130048
    %v102 = vsel %vm100, %v98, 0
    %v105 = vsel %vm100, %v99, 0
    %107 = vmatpush.bf16.msra.mxu0 0
    %108 = vmatpush.bf16.msra.mxu0 0
    %109 = vmatpush.bf16.msra.mxu0 0
    %110 = vmatpush.bf16.msra.mxu0 0
    %111 = vmatpush.bf16.msra.mxu0 0
    %112 = vmatpush.bf16.msra.mxu0 0
    %113 = vmatpush.bf16.msra.mxu0 0
    %114 = vmatpush.bf16.msra.mxu0 %v61
    %115 = vmatmul.bf16.gmra.mxu0 %v102
    %v116 = vpop.f32.mrf.mxu0
    %v117 = vadd.f32 %v73, %v116
    %v118 = vpop.f32.mrf.mxu0
    %v119 = vadd.f32 %v78, %v118
    %120 = vmatmul.bf16.gmra.mxu0 %v105
    %v121 = vpop.f32.mrf.mxu0
    %v122 = vadd.f32 %v83, %v121
    %v123 = vpop.f32.mrf.mxu0
    %v124 = vadd.f32 %v88, %v123
    %125 = vdwg.mxu0
    %v126 = vtanh.pop %v117
    %v127 = vtanh.pop %v119
    %v128 = vtanh.pop %v122
    %v129 = vtanh.pop %v124
    %v130 = vpack.c.bf16 %v127, %v126
    %v131 = vpack.c.bf16 %v129, %v128
    %v132 = vld [vmem:[%s2] sm:$0xf]
    %v133 = vld [vmem:[%s2 + $0x4] sm:$0xf]
    %v134 = vld [vmem:[%s2 + $0x8] sm:$0xf]
    %v135 = vld [vmem:[%s2 + $0xc] sm:$0xf]
    %v136 = vld [vmem:[%s5] sm:$0xff]
    %v137 = vld [vmem:[%s5 + $0x8] sm:$0xff]
    %v138 = vld [vmem:[%s5 + $0x10] sm:$0xff]
    %v139 = vld [vmem:[%s5 + $0x18] sm:$0xff]
    %141 = vset.pattern.permute.xlu0 0
    %142 = vperm.xlu0 %141, %v136
    %v143 = vpop.permute.xlu0 %142
    %146 = vset.pattern.permute.xlu0 0
    %147 = vperm.xlu0 %146, %v137
    %v148 = vpop.permute.xlu0 %147
    %151 = vset.pattern.permute.xlu0 0
    %152 = vperm.xlu0 %151, %v138
    %v153 = vpop.permute.xlu0 %152
    %156 = vset.pattern.permute.xlu0 0
    %157 = vperm.xlu0 %156, %v139
    %v158 = vpop.permute.xlu0 %157
    %v164 = vunpack.c.l.b16 %v132
    %v165 = vunpack.c.l.b16 %v133
    %v166 = vunpack.c.l.b16 %v134
    %v167 = vunpack.c.l.b16 %v135
    %v168 = vpack.c.b16 %v165, %v164
    %v169 = vpack.c.b16 %v167, %v166
    %vm170 = vcmask 261120
    %v172 = vsel %vm170, %v168, 0
    %v175 = vsel %vm170, %v169, 0
    %177 = vmatpush.bf16.msra.mxu0 0
    %178 = vmatpush.bf16.msra.mxu0 0
    %179 = vmatpush.bf16.msra.mxu0 0
    %180 = vmatpush.bf16.msra.mxu0 0
    %181 = vmatpush.bf16.msra.mxu0 0
    %182 = vmatpush.bf16.msra.mxu0 0
    %183 = vmatpush.bf16.msra.mxu0 %v131
    %184 = vmatpush.bf16.msra.mxu0 %v130
    %185 = vmatmul.bf16.gmra.mxu0 %v172
    %v186 = vpop.f32.mrf.mxu0
    %v187 = vadd.f32 %v143, %v186
    %v188 = vpop.f32.mrf.mxu0
    %v189 = vadd.f32 %v148, %v188
    %190 = vmatmul.bf16.gmra.mxu0 %v175
    %v191 = vpop.f32.mrf.mxu0
    %v192 = vadd.f32 %v153, %v191
    %v193 = vpop.f32.mrf.mxu0
    %v194 = vadd.f32 %v158, %v193
    %195 = vdwg.mxu0
    %v196 = vtanh.pop %v187
    %v197 = vtanh.pop %v189
    %v198 = vtanh.pop %v192
    %v199 = vtanh.pop %v194
    %v200 = vpack.c.bf16 %v197, %v196
    %v201 = vpack.c.bf16 %v199, %v198
    %v202 = vld [vmem:[%s3] sm:$0xf]
    %v203 = vld [vmem:[%s6] sm:$0xff]
    %205 = vset.pattern.permute.xlu0 0
    %206 = vperm.xlu0 %205, %v203
    %v207 = vpop.permute.xlu0 %206
    %v210 = vsel %vm170, %v202, 0
    %212 = vmatpush.bf16.msra.mxu0 0
    %213 = vmatpush.bf16.msra.mxu0 0
    %214 = vmatpush.bf16.msra.mxu0 0
    %215 = vmatpush.bf16.msra.mxu0 0
    %216 = vmatpush.bf16.msra.mxu0 0
    %217 = vmatpush.bf16.msra.mxu0 0
    %218 = vmatpush.bf16.msra.mxu0 %v201
    %219 = vmatpush.bf16.msra.mxu0 %v200
    %220 = vmatmul.bf16.gmra.mxu0 %v210
    %v221 = vpop.f32.mrf.mxu0
    %v222 = vadd.f32 %v207, %v221
    %v223 = vpop.f32.mrf.mxu0
    %224 = vdwg.mxu0
    %vm225 = vcmask 64512
    %v226 = vsel %vm225, %v222, -inf
    %v227 = vrot.slane %v226, 4
    %v228 = vmax.f32 %v226, %v227
    %v229 = vrot.slane %v228, 2
    %v230 = vmax.f32 %v228, %v229
    %v231 = vrot.slane %v230, 1
    %v232 = vmax.f32 %v230, %v231
    %v233 = vsub.f32 %v222, %v232
    %v234 = vmul.f32 %v233, 1.442695
    %v235 = vpow.pop %v234
    %v236 = vsel %vm225, %v235, 0.0
    %v237 = vrot.slane %v236, 4
    %v238 = vadd.f32 %v236, %v237
    %v239 = vrot.slane %v238, 2
    %v240 = vadd.f32 %v238, %v239
    %v241 = vrot.slane %v240, 1
    %v242 = vadd.f32 %v240, %v241
    %v243 = vrcp.pop %v242
    %v244 = vmul.f32 %v235, %v243
    %245 = vxpose.xlu0.b32.start [1/16] %v244, 128
    %246 = vxpose.xlu0.b32.cont [2/16] 0.0, 128
    %247 = vxpose.xlu0.b32.cont [3/16] 0.0, 128
    %248 = vxpose.xlu0.b32.cont [4/16] 0.0, 128
    %249 = vxpose.xlu0.b32.cont [5/16] 0.0, 128
    %250 = vxpose.xlu0.b32.cont [6/16] 0.0, 128
    %251 = vxpose.xlu0.b32.cont [7/16] 0.0, 128
    %252 = vxpose.xlu0.b32.cont [8/16] 0.0, 128
    %253 = vxpose.xlu0.b32.cont [9/16] 0.0, 128
    %254 = vxpose.xlu0.b32.cont [10/16] 0.0, 128
    %255 = vxpose.xlu0.b32.cont [11/16] 0.0, 128
    %256 = vxpose.xlu0.b32.cont [12/16] 0.0, 128
    %257 = vxpose.xlu0.b32.cont [13/16] 0.0, 128
    %258 = vxpose.xlu0.b32.cont [14/16] 0.0, 128
    %259 = vxpose.xlu0.b32.cont [15/16] 0.0, 128
    %260 = vxpose.xlu0.b32.end [16/16] 0.0, 128
    %v261 = vpop.trf.xlu0
    %v262 = vpop.trf.xlu0
    %v263 = vpop.trf.xlu0
    %v264 = vpop.trf.xlu0
    %v265 = vpop.trf.xlu0
    %v266 = vpop.trf.xlu0
    %v267 = vpop.trf.xlu0
    %v268 = vpop.trf.xlu0
    %v269 = vpop.trf.xlu0
    %v270 = vpop.trf.xlu0
    %v271 = vpop.trf.xlu0
    %v272 = vpop.trf.xlu0
    %v273 = vpop.trf.xlu0
    %v274 = vpop.trf.xlu0
    %v275 = vpop.trf.xlu0
    %v276 = vpop.trf.xlu0
    %277 = vst.msk [vmem:[#allocation2] sm:$0xff] %vm225, %v261
    // Predicated region
    $region30: #{tpu_custom_call.1} parent=1 // pred_check
      _
    $region31: #{tpu_custom_call.1} parent=1 // pred_check_branch
      %279 = sbr.rel (0) target = $region33
    $region32: #{tpu_custom_call.1} parent=1 // pred_region
      %281 = vsyncadd [#allocation3], 0
      %s283 = sshll.u32 [#allocation2], 4
      %s284 = int_to_ptr.vmem [resolvable:$true] %s283
      %s285 = sshll.u32 %s7, 4
      %s286 = int_to_ptr.hbm [resolvable:$true] %s285
      %288 = dma.vmem_to_hbm [thread:$0]  %s284, 128, %s286, [#allocation3]
    $region33: #{tpu_custom_call.1} parent=1 // pred_fallthru
      _
    // Predicated region
    $region34: #{tpu_custom_call.1} parent=1 // pred_check
      _
    $region35: #{tpu_custom_call.1} parent=1 // pred_check_branch
      %290 = sbr.rel (0) target = $region37
    $region36: #{tpu_custom_call.1} parent=1 // pred_region
      %292 = dma.done [#allocation3], 128
    $region37: #{tpu_custom_call.1} parent=1 // pred_fallthru
      _
    %293 = vsyncpa [#allocation3], 1

</llo_original>
